<compile_context>
chip_gen: v6e
topology: v6e:2x2x1
jax: 0.10.0
libtpu: 0.0.40
codegen_flags: <defaults>
</compile_context>

<pallas_src>
import jax
import jax.numpy as jnp
from jax.experimental import pallas as pl
from jax.experimental.pallas import tpu as pltpu

HIDDEN = 512
_MIB = 1024 * 1024


def _round_up(x, m):
    return (x + m - 1) // m * m


def _physical_vmem_bytes():
    """Per-core VMEM capacity; conservative 64 MiB (v7x) fallback."""
    try:
        cap = getattr(pltpu.get_tpu_info(), "vmem_capacity_bytes", None)
        if cap:
            return int(cap)
    except Exception:
        pass
    return 64 * _MIB


def _choose_batch_tile(B, cap):
    """Largest batch tile from {512..8} whose padding waste is small, then
    split so the 'parallel' batch axis has >= 2 tiles (v7x megacore)."""
    cap = max(8, cap)
    b8 = _round_up(B, 8)
    bt = 8
    for cand in (512, 256, 128, 64, 32, 16, 8):
        if cand > cap or cand > b8:
            continue
        if _round_up(B, cand) - B <= max(B // 8, 8):
            bt = cand
            break
    Bp = _round_up(B, bt)
    if Bp // bt < 2 and Bp >= 16:       # give both v7x TensorCores a batch tile
        bt = _round_up((Bp + 1) // 2, 8)
        Bp = _round_up(B, bt)
    return bt, Bp


def _choose_tile(Pp, cap, fits):
    """Largest multiple of 128 <= cap that divides Pp and satisfies `fits`."""
    t = max(128, min(cap, Pp))
    t -= t % 128
    while t >= 256:
        if Pp % t == 0 and fits(t):
            return t
        t -= 128
    return 128


# --------------------------------------------------------------------------
# Kernels
# --------------------------------------------------------------------------
def _resident_kernel(x_ref, w1_ref, b1_ref, w2_ref, b2_ref, o_ref, h_ref):
    """Grid = (batch tile i, fc2-output tile j); j innermost.

    x_ref : (bt, Pp)   bf16   batch tile of the input
    w1_ref: (Pp, 512)  bf16   W1^T, resident, single-buffered
    b1_ref: (1, 512)   f32
    w2_ref: (512, tn)  bf16   W2^T N tile
    b2_ref: (1, tn)    f32
    o_ref : (bt, tn)   out dtype
    h_ref : (bt, 512)  f32    VMEM scratch carrying fc1 output across j
    """
    j = pl.program_id(1)

    @pl.when(j == 0)
    def _():
        h = jnp.dot(x_ref[...], w1_ref[...], preferred_element_type=jnp.float32)
        h_ref[...] = h + b1_ref[...]

    y = jnp.dot(h_ref[...].astype(jnp.bfloat16), w2_ref[...],
                preferred_element_type=jnp.float32)
    o_ref[...] = (y + b2_ref[...]).astype(o_ref.dtype)


def _make_streaming_kernel(bt, tk, n_k):
    """fc1 K-tiled variant for large num_products: x and W1^T stay in HBM
    (memory_space=pl.ANY) and are streamed in (bt, tk)/(tk, 512) chunks with a
    manual double buffer, so VMEM use is independent of the catalog size."""

    def kernel(x_hbm, w1_hbm, b1_ref, w2_ref, b2_ref, o_ref,
               h_ref, xbuf, wbuf, sem):
        i = pl.program_id(0)
        j = pl.program_id(1)

        @pl.when(j == 0)
        def _fc1():
            row0 = i * bt

            def start_fetch(k, slot):
                col = k * tk
                pltpu.make_async_copy(
                    x_hbm.at[pl.ds(row0, bt), pl.ds(col, tk)],
                    xbuf.at[slot], sem.at[0, slot]).start()
                pltpu.make_async_copy(
                    w1_hbm.at[pl.ds(col, tk), :],
                    wbuf.at[slot], sem.at[1, slot]).start()

            start_fetch(0, 0)
            h_ref[...] = jnp.zeros_like(h_ref)

            @pl.loop(0, n_k)
            def _body(k):
                slot = k & 1
                # Wait on the in-flight chunk (descriptor shapes just have to
                # match the destination buffers).
                pltpu.make_async_copy(
                    x_hbm.at[pl.ds(0, bt), pl.ds(0, tk)],
                    xbuf.at[slot], sem.at[0, slot]).wait()
                pltpu.make_async_copy(
                    w1_hbm.at[pl.ds(0, tk), :],
                    wbuf.at[slot], sem.at[1, slot]).wait()

                @pl.when(k + 1 < n_k)
                def _():
                    start_fetch(k + 1, 1 - slot)

                h_ref[...] += jnp.dot(xbuf[slot], wbuf[slot],
                                      preferred_element_type=jnp.float32)

            h_ref[...] += b1_ref[...]

        y = jnp.dot(h_ref[...].astype(jnp.bfloat16), w2_ref[...],
                    preferred_element_type=jnp.float32)
        o_ref[...] = (y + b2_ref[...]).astype(o_ref.dtype)

    return kernel


# --------------------------------------------------------------------------
# Parameter prep (one-time, load-time) + forward pass
# --------------------------------------------------------------------------
def prepare_params(w1, b1, w2, b2):
    """One-time parameter prep (do this at model-load time, NOT per call):
    transpose to x @ W layout, zero-pad num_products to a multiple of 128
    lanes, cast weights to bf16 for the MXU, keep biases in f32.

    w1: (512, P)  b1: (512,)   -- PyTorch nn.Linear(num_products, 512)
    w2: (P, 512)  b2: (P,)     -- PyTorch nn.Linear(512, num_products)
    """
    hidden, p = w1.shape
    assert hidden == HIDDEN and w2.shape == (p, HIDDEN)
    assert b1.shape == (HIDDEN,) and b2.shape == (p,)

    p_pad = _round_up(p, 128)

    w1t = jnp.zeros((p_pad, HIDDEN), jnp.bfloat16)
    w1t = w1t.at[:p, :].set(jnp.transpose(w1).astype(jnp.bfloat16))     # (Pp, 512)

    w2t = jnp.zeros((HIDDEN, p_pad), jnp.bfloat16)
    w2t = w2t.at[:, :p].set(jnp.transpose(w2).astype(jnp.bfloat16))     # (512, Pp)

    b1_2d = b1.astype(jnp.float32).reshape(1, HIDDEN)                   # (1, 512)
    b2_2d = jnp.zeros((1, p_pad), jnp.float32).at[0, :p].set(
        b2.astype(jnp.float32))                                         # (1, Pp)

    return w1t, b1_2d, w2t, b2_2d, p


def awesome_model_v2_fwd(x, w1t, b1_2d, w2t, b2_2d, num_products, *,
                         batch_tile=512, max_n_tile=2048, max_k_tile=1024,
                         out_dtype=jnp.float32, force_streaming_fc1=False,
                         vmem_budget_bytes=None):
    """Forward pass with pre-prepared params.  x: (B, num_products)."""
    B, P = x.shape
    assert P == num_products
    Pp = w1t.shape[0]
    out_dtype = jnp.dtype(out_dtype)
    out_bytes = out_dtype.itemsize

    physical_vmem = _physical_vmem_bytes()
    budget = int(vmem_budget_bytes) if vmem_budget_bytes else int(0.75 * physical_vmem)

    bt, Bp = _choose_batch_tile(B, batch_tile)
    n_i = Bp // bt

    def fc2_cost(tn):  # double-buffered W2 / b2 / out tiles
        return 2 * (HIDDEN * tn * 2 + tn * 4 + bt * tn * out_bytes)

    # Resident path footprint: x batch tile (2 buffers, bf16) + whole W1^T
    # (single buffer) + b1 + f32 h scratch.
    resident_base = (2 * bt * Pp * 2
                     + Pp * HIDDEN * 2
                     + HIDDEN * 4
                     + bt * HIDDEN * 4)
    streaming = force_streaming_fc1 or (resident_base + fc2_cost(128) > budget)

    if not streaming:
        tn = _choose_tile(Pp, max_n_tile,
                          lambda t: resident_base + fc2_cost(t) <= budget)
        tk, n_k = Pp, 1
        footprint = resident_base + fc2_cost(tn)
    else:
        tk = _choose_tile(Pp, max_k_tile, lambda t: True)
        n_k = Pp // tk
        stream_base = (2 * bt * tk * 2 + 2 * tk * HIDDEN * 2
                       + HIDDEN * 4 + bt * HIDDEN * 4)
        tn = _choose_tile(Pp, max_n_tile,
                          lambda t: stream_base + fc2_cost(t) <= budget)
        footprint = stream_base + fc2_cost(tn)

    # Pad + cast the activations (single fused pass; skipped when aligned and
    # already bf16; zero rows/cols do not change the valid outputs).
    x_bf16 = x if x.dtype == jnp.bfloat16 else x.astype(jnp.bfloat16)
    if B != Bp or P != Pp:
        x_bf16 = jnp.pad(x_bf16, ((0, Bp - B), (0, Pp - P)))

    grid = (n_i, Pp // tn)

    # Scoped-VMEM limit: actual footprint + headroom, capped below physical.
    vmem_limit = max(32 * _MIB, footprint + 6 * _MIB)
    vmem_limit = min(vmem_limit, max(int(0.9 * physical_vmem),
                                     footprint + 2 * _MIB))

    cost = pl.CostEstimate(
        flops=4 * Bp * Pp * HIDDEN,
        transcendentals=0,
        bytes_accessed=int(Bp * Pp * 2
                           + Pp * HIDDEN * 2 * (1 if not streaming else n_i)
                           + HIDDEN * Pp * 2 * n_i
                           + Bp * Pp * out_bytes
                           + (HIDDEN + Pp) * 4))

    common = dict(
        out_shape=jax.ShapeDtypeStruct((Bp, Pp), out_dtype),
        compiler_params=pltpu.CompilerParams(
            dimension_semantics=("parallel", "arbitrary"),
            vmem_limit_bytes=int(vmem_limit),
        ),
        cost_estimate=cost,
    )

    b1_spec = pl.BlockSpec((1, HIDDEN), lambda i, j: (0, 0),
                           pipeline_mode=pl.Buffered(1))
    fc2_specs = [
        pl.BlockSpec((HIDDEN, tn), lambda i, j: (0, j)),    # W2^T N tile
        pl.BlockSpec((1, tn), lambda i, j: (0, j)),         # b2 N tile
    ]
    out_spec = pl.BlockSpec((bt, tn), lambda i, j: (i, j))

    if not streaming:
        out_pad = pl.pallas_call(
            _resident_kernel,
            grid_spec=pltpu.PrefetchScalarGridSpec(
                num_scalar_prefetch=0,
                grid=grid,
                in_specs=[
                    pl.BlockSpec((bt, Pp), lambda i, j: (i, 0)),      # x tile
                    pl.BlockSpec((Pp, HIDDEN), lambda i, j: (0, 0),
                                 pipeline_mode=pl.Buffered(1)),       # W1^T
                    b1_spec,
                ] + fc2_specs,
                out_specs=out_spec,
                scratch_shapes=[pltpu.VMEM((bt, HIDDEN), jnp.float32)],
            ),
            **common,
        )(x_bf16, w1t, b1_2d, w2t, b2_2d)
    else:
        out_pad = pl.pallas_call(
            _make_streaming_kernel(bt, tk, n_k),
            grid_spec=pltpu.PrefetchScalarGridSpec(
                num_scalar_prefetch=0,
                grid=grid,
                in_specs=[
                    pl.BlockSpec(memory_space=pl.ANY),                # x in HBM
                    pl.BlockSpec(memory_space=pl.ANY),                # W1^T in HBM
                    b1_spec,
                ] + fc2_specs,
                out_specs=out_spec,
                scratch_shapes=[
                    pltpu.VMEM((bt, HIDDEN), jnp.float32),            # h
                    pltpu.VMEM((2, bt, tk), jnp.bfloat16),            # x chunks
                    pltpu.VMEM((2, tk, HIDDEN), jnp.bfloat16),        # W1 chunks
                    pltpu.SemaphoreType.DMA((2, 2)),
                ],
            ),
            **common,
        )(x_bf16, w1t, b1_2d, w2t, b2_2d)

    return out_pad[:B, :P]


def awesome_model_v2(x, w1, b1, w2, b2, **kwargs):
    """Convenience wrapper taking PyTorch-layout parameters.

    NOTE: for real serving call prepare_params() ONCE at load time and reuse
    the result with awesome_model_v2_fwd(); re-preparing (transpose/pad/cast
    of both weight matrices) per call is pure overhead.
    """
    w1t, b1_2d, w2t, b2_2d, p = prepare_params(w1, b1, w2, b2)
    return awesome_model_v2_fwd(x, w1t, b1_2d, w2t, b2_2d, p, **kwargs)


# --------------------------------------------------------------------------
# Self-test
# --------------------------------------------------------------------------
def _reference(x, w1, b1, w2, b2):
    h = x @ w1.T + b1
    return h @ w2.T + b2


def _make_case(key, B, P):
    k_x, k_w1, k_b1, k_w2, k_b2 = jax.random.split(key, 5)
    x = jax.random.normal(k_x, (B, P), dtype=jnp.float32)
    scale1 = 1.0 / jnp.sqrt(jnp.float32(P))
    scale2 = 1.0 / jnp.sqrt(jnp.float32(HIDDEN))
    w1 = jax.random.uniform(k_w1, (HIDDEN, P), jnp.float32, -scale1, scale1)
    b1 = jax.random.uniform(k_b1, (HIDDEN,), jnp.float32, -scale1, scale1)
    w2 = jax.random.uniform(k_w2, (P, HIDDEN), jnp.float32, -scale2, scale2)
    b2 = jax.random.uniform(k_b2, (P,), jnp.float32, -scale2, scale2)
    return x, w1, b1, w2, b2


def _check(out, ref, name):
    assert out.shape == ref.shape, f"{name}: shape {out.shape} != {ref.shape}"
    assert bool(jnp.allclose(out, ref, atol=5e-2, rtol=5e-2)), f"{name}: mismatch"


if __name__ == "__main__":
    keys = jax.random.split(jax.random.PRNGKey(0), 4)

    # Case 1: the module's tiny demo shape (B=8, num_products=32).
    x, w1, b1, w2, b2 = _make_case(keys[0], B=8, P=32)
    params = prepare_params(w1, b1, w2, b2)            # one-time prep
    out = jax.block_until_ready(awesome_model_v2_fwd(x, *params))
    _check(out, _reference(x, w1, b1, w2, b2), "case1")

    # Case 2: ragged batch + non-tile-multiple num_products (padding paths,
    # several batch tiles, single lane-dense fc2 tile).
    x, w1, b1, w2, b2 = _make_case(keys[1], B=300, P=640)
    params = prepare_params(w1, b1, w2, b2)
    out = jax.block_until_ready(awesome_model_v2_fwd(x, *params))
    _check(out, _reference(x, w1, b1, w2, b2), "case2")

    # Case 3: multiple fc2 N tiles -> exercises fc1 reuse across j (resident).
    x, w1, b1, w2, b2 = _make_case(keys[2], B=96, P=1024)
    params = prepare_params(w1, b1, w2, b2)
    out = jax.block_until_ready(
        awesome_model_v2_fwd(x, *params, max_n_tile=256))
    _check(out, _reference(x, w1, b1, w2, b2), "case3")

    # Case 4: force the large-catalog path (fc1 K-streaming from HBM with a
    # manual double-buffered DMA loop + multiple fc2 tiles + 2 batch tiles).
    x, w1, b1, w2, b2 = _make_case(keys[3], B=64, P=1280)
    params = prepare_params(w1, b1, w2, b2)
    out = jax.block_until_ready(
        awesome_model_v2_fwd(x, *params, force_streaming_fc1=True,
                             max_k_tile=256, max_n_tile=256))
    _check(out, _reference(x, w1, b1, w2, b2), "case4")

    print("KERNEL_OK")
</pallas_src>

<mosaic_0001>
module attributes {stable_mosaic.version = 11 : i64} {
  func.func @_resident_kernel(%arg0: i32, %arg1: i32, %arg2: memref<8x128xbf16, #tpu.memory_space<vmem>>, %arg3: memref<128x512xbf16, #tpu.memory_space<vmem>>, %arg4: memref<1x512xf32, #tpu.memory_space<vmem>>, %arg5: memref<512x128xbf16, #tpu.memory_space<vmem>>, %arg6: memref<1x128xf32, #tpu.memory_space<vmem>>, %arg7: memref<8x128xf32, #tpu.memory_space<vmem>>, %arg8: memref<8x512xf32, #tpu.memory_space<vmem>>) attributes {dimension_semantics = [#tpu.dimension_semantics<parallel>, #tpu.dimension_semantics<arbitrary>], iteration_bounds = array<i64: 1, 1>, scalar_prefetch = 0 : i64, scratch_operands = 1 : i64, tpu.core_type = #tpu.core_type<tc>, window_params = [{transform_indices = @transform_0, window_bounds = array<i64: 8, 128>}, {pipeline_mode = #tpu.pipeline_mode<synchronous>, transform_indices = @transform_1, window_bounds = array<i64: 128, 512>}, {pipeline_mode = #tpu.pipeline_mode<synchronous>, transform_indices = @transform_2, window_bounds = array<i64: 1, 512>}, {transform_indices = @transform_3, window_bounds = array<i64: 512, 128>}, {transform_indices = @transform_4, window_bounds = array<i64: 1, 128>}, {transform_indices = @transform_5, window_bounds = array<i64: 8, 128>}]} {
    %c0_i32 = arith.constant 0 : i32
    %0 = arith.cmpi eq, %arg1, %c0_i32 : i32
    %1 = arith.extui %0 : i1 to i32
    %c0_i32_0 = arith.constant 0 : i32
    %2 = arith.cmpi ne, %1, %c0_i32_0 : i32
    scf.if %2 {
      %c0_8 = arith.constant 0 : index
      %c0_9 = arith.constant 0 : index
      %11 = vector.load %arg2[%c0_8, %c0_9] : memref<8x128xbf16, #tpu.memory_space<vmem>>, vector<8x128xbf16>
      %c0_10 = arith.constant 0 : index
      %c0_11 = arith.constant 0 : index
      %12 = vector.load %arg3[%c0_10, %c0_11] : memref<128x512xbf16, #tpu.memory_space<vmem>>, vector<128x512xbf16>
      %cst_12 = arith.constant dense<0.000000e+00> : vector<8x512xf32>
      %13 = tpu.matmul %11, %12, %cst_12 {dimension_numbers = #tpu.dot_dimension_numbers<[1], [0], [0], [1], [0, 0, 1, 1], [], []>} : vector<8x128xbf16>, vector<128x512xbf16>, vector<8x512xf32> -> vector<8x512xf32>
      %c0_13 = arith.constant 0 : index
      %c0_14 = arith.constant 0 : index
      %14 = vector.load %arg4[%c0_13, %c0_14] : memref<1x512xf32, #tpu.memory_space<vmem>>, vector<1x512xf32>
      %15 = vector.broadcast %14 : vector<1x512xf32> to vector<8x512xf32>
      %16 = arith.addf %13, %15 : vector<8x512xf32>
      %c0_15 = arith.constant 0 : index
      %c0_16 = arith.constant 0 : index
      %17 = vector.load %arg8[%c0_15, %c0_16] : memref<8x512xf32, #tpu.memory_space<vmem>>, vector<8x512xf32>
      tpu.vector_store %arg8[%c0_15, %c0_16], %16 {strides = array<i32>} : memref<8x512xf32, #tpu.memory_space<vmem>>, vector<8x512xf32>,
    } else {
    }
    %c0 = arith.constant 0 : index
    %c0_1 = arith.constant 0 : index
    %3 = vector.load %arg8[%c0, %c0_1] : memref<8x512xf32, #tpu.memory_space<vmem>>, vector<8x512xf32>
    %4 = arith.truncf %3 : vector<8x512xf32> to vector<8x512xbf16>
    %c0_2 = arith.constant 0 : index
    %c0_3 = arith.constant 0 : index
    %5 = vector.load %arg5[%c0_2, %c0_3] : memref<512x128xbf16, #tpu.memory_space<vmem>>, vector<512x128xbf16>
    %cst = arith.constant dense<0.000000e+00> : vector<8x128xf32>
    %6 = tpu.matmul %4, %5, %cst {dimension_numbers = #tpu.dot_dimension_numbers<[1], [0], [0], [1], [0, 0, 1, 1], [], []>} : vector<8x512xbf16>, vector<512x128xbf16>, vector<8x128xf32> -> vector<8x128xf32>
    %c0_4 = arith.constant 0 : index
    %c0_5 = arith.constant 0 : index
    %7 = vector.load %arg6[%c0_4, %c0_5] : memref<1x128xf32, #tpu.memory_space<vmem>>, vector<1x128xf32>
    %8 = vector.broadcast %7 : vector<1x128xf32> to vector<8x128xf32>
    %9 = arith.addf %6, %8 : vector<8x128xf32>
    %c0_6 = arith.constant 0 : index
    %c0_7 = arith.constant 0 : index
    %10 = vector.load %arg7[%c0_6, %c0_7] : memref<8x128xf32, #tpu.memory_space<vmem>>, vector<8x128xf32>
    tpu.vector_store %arg7[%c0_6, %c0_7], %9 {strides = array<i32>} : memref<8x128xf32, #tpu.memory_space<vmem>>, vector<8x128xf32>,
    return
  }
  func.func @transform_0(%arg0: i32, %arg1: i32) -> (i32, i32) {
    %c0_i32 = arith.constant 0 : i32
    %c0_i32_0 = arith.constant 0 : i32
    return %arg0, %c0_i32 : i32, i32
  }
  func.func @transform_1(%arg0: i32, %arg1: i32) -> (i32, i32) {
    %c0_i32 = arith.constant 0 : i32
    %c0_i32_0 = arith.constant 0 : i32
    %c0_i32_1 = arith.constant 0 : i32
    return %c0_i32, %c0_i32_0 : i32, i32
  }
  func.func @transform_2(%arg0: i32, %arg1: i32) -> (i32, i32) {
    %c0_i32 = arith.constant 0 : i32
    %c0_i32_0 = arith.constant 0 : i32
    %c0_i32_1 = arith.constant 0 : i32
    return %c0_i32, %c0_i32_0 : i32, i32
  }
  func.func @transform_3(%arg0: i32, %arg1: i32) -> (i32, i32) {
    %c0_i32 = arith.constant 0 : i32
    %c0_i32_0 = arith.constant 0 : i32
    return %c0_i32, %arg1 : i32, i32
  }
  func.func @transform_4(%arg0: i32, %arg1: i32) -> (i32, i32) {
    %c0_i32 = arith.constant 0 : i32
    %c0_i32_0 = arith.constant 0 : i32
    return %c0_i32, %arg1 : i32, i32
  }
  func.func @transform_5(%arg0: i32, %arg1: i32) -> (i32, i32) {
    %c0_i32 = arith.constant 0 : i32
    return %arg0, %arg1 : i32, i32
  }
}

</mosaic_0001>

<llo_original>
// kernel: tpu_custom_call.1
$region0: #{tpu_custom_call.1}
  #allocation0 [shape = 'u32[]', space=smem, size = 0x4, offset = 0x4, fixed_abs, tag = 'smem constant byte address 0x4 - core index']
  #allocation1 [shape = 'u32[144,128]{1,0:T(1,128)}', space=vmem, size = 0x12000, scoped, tag = 'internal scratch']
  #allocation2 [shape = 'f32[8,512]{1,0:T(8,128)}', space=vmem, size = 0x4000, scoped, tag = 'scratch operand']
  %s0 = inlined_call_operand.hbm [shape: bf16[8,128], index: 0, kind: input, shape index: {}]
  %s1 = inlined_call_operand.hbm [shape: bf16[128,512], index: 1, kind: input, shape index: {}]
  %s2 = inlined_call_operand.hbm [shape: f32[1,512], index: 2, kind: input, shape index: {}]
  %s3 = inlined_call_operand.hbm [shape: bf16[512,128], index: 3, kind: input, shape index: {}]
  %s4 = inlined_call_operand.vmem [shape: f32[1,128], index: 4, kind: input, shape index: {}]
  %s5 = inlined_call_operand.hbm [shape: f32[8,128], index: 5, kind: output, shape index: {}]
  %s6 = sld [smem:[#allocation0]]
  $region50: #{tpu_custom_call.1} parent=0
    _
  %s8 = ssub.s32 1, %s6
  %s9 = scalar_select 0, %s8, %s6
  $region1: #{tpu_custom_call.1} parent=0
    #allocation3 [shape = 'u8[2048]{0}', space=vmem, size = 0x800, scoped, tag = 'input window, operand 0, single buffered']
    #allocation4 [shape = 's32[1]{0}', space=sflag, size = 0x4, scoped, tag = 'scoped memory for tpu_custom_call.1']
    #allocation5 [shape = 's32[1]{0}', space=sflag, size = 0x4, scoped, tag = 'scoped memory for tpu_custom_call.1']
    #allocation6 [shape = 'u8[131072]{0}', space=vmem, size = 0x20000, scoped, tag = 'input window, operand 1, single buffered']
    #allocation7 [shape = 's32[1]{0}', space=sflag, size = 0x4, scoped, tag = 'scoped memory for tpu_custom_call.1']
    #allocation8 [shape = 'u8[2048]{0}', space=vmem, size = 0x800, scoped, tag = 'input window, operand 2, single buffered']
    #allocation9 [shape = 'u8[131072]{0}', space=vmem, size = 0x20000, scoped, tag = 'input window, operand 3, single buffered']
    #allocation10 [shape = 's32[1]{0}', space=sflag, size = 0x4, scoped, tag = 'scoped memory for tpu_custom_call.1']
    #allocation11 [shape = 'u8[4096]{0}', space=vmem, size = 0x1000, scoped, tag = 'output window, operand 0, single buffered']
    %10 = vsyncpa [#allocation4], 0
    %11 = vsyncpa [#allocation7], 0
    %12 = vsyncpa [#allocation10], 0
    %13 = vsyncpa [#allocation5], 0
    // Predicated region
    $region2: #{tpu_custom_call.1} parent=1 // pred_check
      _
    $region3: #{tpu_custom_call.1} parent=1 // pred_check_branch
      %15 = sbr.rel (0) target = $region5
    $region4: #{tpu_custom_call.1} parent=1 // pred_region
      %s17 = ssub.s32 64, 64
      %18 = vsyncadd [#allocation4], %s17
      %s20 = sshll.u32 [#allocation3], 4
      %s21 = int_to_ptr.vmem [resolvable:$true] %s20
      %23 = dma.hbm_to_vmem [thread:$0]  %s0, 64, %s21, [#allocation4]
    $region5: #{tpu_custom_call.1} parent=1 // pred_fallthru
      _
    // Predicated region
    $region6: #{tpu_custom_call.1} parent=1 // pred_check
      _
    $region7: #{tpu_custom_call.1} parent=1 // pred_check_branch
      %25 = sbr.rel (0) target = $region9
    $region8: #{tpu_custom_call.1} parent=1 // pred_region
      %s27 = ssub.s32 4096, 4096
      %28 = vsyncadd [#allocation7], %s27
      %s29 = sshll.u32 [#allocation6], 4
      %s30 = int_to_ptr.vmem [resolvable:$true] %s29
      %35 = dma.hbm_to_vmem [thread:$0]  %s1, 4096, %s30, [#allocation7], 256, 256, 16
    $region9: #{tpu_custom_call.1} parent=1 // pred_fallthru
      _
    // Predicated region
    $region10: #{tpu_custom_call.1} parent=1 // pred_check
      _
    $region11: #{tpu_custom_call.1} parent=1 // pred_check_branch
      %37 = sbr.rel (0) target = $region13
    $region12: #{tpu_custom_call.1} parent=1 // pred_region
      %s39 = ssub.s32 64, 64
      %40 = vsyncadd [#allocation7], %s39
      %s42 = sshll.u32 [#allocation8], 4
      %s43 = int_to_ptr.vmem [resolvable:$true] %s42
      %45 = dma.hbm_to_vmem [thread:$0]  %s2, 64, %s43, [#allocation7]
    $region13: #{tpu_custom_call.1} parent=1 // pred_fallthru
      _
    // Predicated region
    $region14: #{tpu_custom_call.1} parent=1 // pred_check
      _
    $region15: #{tpu_custom_call.1} parent=1 // pred_check_branch
      %47 = sbr.rel (0) target = $region17
    $region16: #{tpu_custom_call.1} parent=1 // pred_region
      %s49 = ssub.s32 4096, 4096
      %50 = vsyncadd [#allocation10], %s49
      %s51 = sshll.u32 [#allocation9], 4
      %s52 = int_to_ptr.vmem [resolvable:$true] %s51
      %57 = dma.hbm_to_vmem [thread:$0]  %s3, 4096, %s52, [#allocation10], 64, 64, 4
    $region17: #{tpu_custom_call.1} parent=1 // pred_fallthru
      _
    // Predicated region
    $region18: #{tpu_custom_call.1} parent=1 // pred_check
      _
    $region19: #{tpu_custom_call.1} parent=1 // pred_check_branch
      %59 = sbr.rel (0) target = $region21
    $region20: #{tpu_custom_call.1} parent=1 // pred_region
      _
    $region21: #{tpu_custom_call.1} parent=1 // pred_fallthru
      _
    // Predicated region
    $region22: #{tpu_custom_call.1} parent=1 // pred_check
      _
    $region23: #{tpu_custom_call.1} parent=1 // pred_check_branch
      %61 = sbr.rel (0) target = $region25
    $region24: #{tpu_custom_call.1} parent=1 // pred_region
      %62 = dma.done [#allocation4], 64
    $region25: #{tpu_custom_call.1} parent=1 // pred_fallthru
      _
    // Predicated region
    $region26: #{tpu_custom_call.1} parent=1 // pred_check
      _
    $region27: #{tpu_custom_call.1} parent=1 // pred_check_branch
      %64 = sbr.rel (0) target = $region29
    $region28: #{tpu_custom_call.1} parent=1 // pred_region
      %65 = dma.done [#allocation7], 4096
    $region29: #{tpu_custom_call.1} parent=1 // pred_fallthru
      _
    // Predicated region
    $region30: #{tpu_custom_call.1} parent=1 // pred_check
      _
    $region31: #{tpu_custom_call.1} parent=1 // pred_check_branch
      %67 = sbr.rel (0) target = $region33
    $region32: #{tpu_custom_call.1} parent=1 // pred_region
      %68 = dma.done [#allocation7], 64
    $region33: #{tpu_custom_call.1} parent=1 // pred_fallthru
      _
    // Predicated region
    $region34: #{tpu_custom_call.1} parent=1 // pred_check
      _
    $region35: #{tpu_custom_call.1} parent=1 // pred_check_branch
      %70 = sbr.rel (0) target = $region37
    $region36: #{tpu_custom_call.1} parent=1 // pred_region
      %71 = dma.done [#allocation10], 4096
    $region37: #{tpu_custom_call.1} parent=1 // pred_fallthru
      _
    %p73 = scmp.eq.s32.totalorder 0, 0
    // Predicated region
    $region38: #{tpu_custom_call.1} parent=1 // pred_check
      %p74 = pneg %p73
    $region39: #{tpu_custom_call.1} parent=1 // pred_check_branch
      %76 = sbr.rel (%p74) target = $region41
    $region40: #{tpu_custom_call.1} parent=1 // pred_region
      %v77 = vld [vmem:[#allocation3] sm:$0xf]
      %v78 = vld [vmem:[#allocation6] sm:$0xff]
      %v79 = vld [vmem:[#allocation6 + $0x8] sm:$0xff]
      %v80 = vld [vmem:[#allocation6 + $0x10] sm:$0xff]
      %v81 = vld [vmem:[#allocation6 + $0x18] sm:$0xff]
      %v82 = vld [vmem:[#allocation6 + $0x20] sm:$0xff]
      %v83 = vld [vmem:[#allocation6 + $0x28] sm:$0xff]
      %v84 = vld [vmem:[#allocation6 + $0x30] sm:$0xff]
      %v85 = vld [vmem:[#allocation6 + $0x38] sm:$0xff]
      %v86 = vld [vmem:[#allocation6 + $0x40] sm:$0xff]
      %v87 = vld [vmem:[#allocation6 + $0x48] sm:$0xff]
      %v88 = vld [vmem:[#allocation6 + $0x50] sm:$0xff]
      %v89 = vld [vmem:[#allocation6 + $0x58] sm:$0xff]
      %v90 = vld [vmem:[#allocation6 + $0x60] sm:$0xff]
      %v91 = vld [vmem:[#allocation6 + $0x68] sm:$0xff]
      %v92 = vld [vmem:[#allocation6 + $0x70] sm:$0xff]
      %v93 = vld [vmem:[#allocation6 + $0x78] sm:$0xff]
      %v94 = vld [vmem:[#allocation6 + $0x80] sm:$0xff]
      %v95 = vld [vmem:[#allocation6 + $0x88] sm:$0xff]
      %v96 = vld [vmem:[#allocation6 + $0x90] sm:$0xff]
      %v97 = vld [vmem:[#allocation6 + $0x98] sm:$0xff]
      %v98 = vld [vmem:[#allocation6 + $0xa0] sm:$0xff]
      %v99 = vld [vmem:[#allocation6 + $0xa8] sm:$0xff]
      %v100 = vld [vmem:[#allocation6 + $0xb0] sm:$0xff]
      %v101 = vld [vmem:[#allocation6 + $0xb8] sm:$0xff]
      %v102 = vld [vmem:[#allocation6 + $0xc0] sm:$0xff]
      %v103 = vld [vmem:[#allocation6 + $0xc8] sm:$0xff]
      %v104 = vld [vmem:[#allocation6 + $0xd0] sm:$0xff]
      %v105 = vld [vmem:[#allocation6 + $0xd8] sm:$0xff]
      %v106 = vld [vmem:[#allocation6 + $0xe0] sm:$0xff]
      %v107 = vld [vmem:[#allocation6 + $0xe8] sm:$0xff]
      %v108 = vld [vmem:[#allocation6 + $0xf0] sm:$0xff]
      %v109 = vld [vmem:[#allocation6 + $0xf8] sm:$0xff]
      %v110 = vld [vmem:[#allocation8] sm:$0xf]
      %v112 = vlaneseq
      %v113 = vshrl.u32 %v112, 7
      %v114 = vsub.s32 0, %v113
      %v115 = vrot.slane %v110, %v114
      %v116 = vlaneseq
      %v117 = vshrl.u32 %v116, 7
      %v118 = vsub.s32 1, %v117
      %v119 = vrot.slane %v110, %v118
      %v120 = vlaneseq
      %v121 = vshrl.u32 %v120, 7
      %v122 = vsub.s32 2, %v121
      %v123 = vrot.slane %v110, %v122
      %v124 = vlaneseq
      %v125 = vshrl.u32 %v124, 7
      %v126 = vsub.s32 3, %v125
      %v127 = vrot.slane %v110, %v126
      %v164 = vunpack.c.l.b16 %v78
      %v165 = vunpack.c.h.b16 %v78
      %v166 = vunpack.c.l.b16 %v79
      %v167 = vunpack.c.h.b16 %v79
      %v168 = vunpack.c.l.b16 %v80
      %v169 = vunpack.c.h.b16 %v80
      %v170 = vunpack.c.l.b16 %v81
      %v171 = vunpack.c.h.b16 %v81
      %v172 = vunpack.c.l.b16 %v82
      %v173 = vunpack.c.h.b16 %v82
      %v174 = vunpack.c.l.b16 %v83
      %v175 = vunpack.c.h.b16 %v83
      %v176 = vunpack.c.l.b16 %v84
      %v177 = vunpack.c.h.b16 %v84
      %v178 = vunpack.c.l.b16 %v85
      %v179 = vunpack.c.h.b16 %v85
      %v180 = vunpack.c.l.b16 %v86
      %v181 = vunpack.c.h.b16 %v86
      %v182 = vunpack.c.l.b16 %v87
      %v183 = vunpack.c.h.b16 %v87
      %v184 = vunpack.c.l.b16 %v88
      %v185 = vunpack.c.h.b16 %v88
      %v186 = vunpack.c.l.b16 %v89
      %v187 = vunpack.c.h.b16 %v89
      %v188 = vunpack.c.l.b16 %v90
      %v189 = vunpack.c.h.b16 %v90
      %v190 = vunpack.c.l.b16 %v91
      %v191 = vunpack.c.h.b16 %v91
      %v192 = vunpack.c.l.b16 %v92
      %v193 = vunpack.c.h.b16 %v92
      %v194 = vunpack.c.l.b16 %v93
      %v195 = vunpack.c.h.b16 %v93
      %v196 = vunpack.c.l.b16 %v94
      %v197 = vunpack.c.h.b16 %v94
      %v198 = vunpack.c.l.b16 %v95
      %v199 = vunpack.c.h.b16 %v95
      %v200 = vunpack.c.l.b16 %v96
      %v201 = vunpack.c.h.b16 %v96
      %v202 = vunpack.c.l.b16 %v97
      %v203 = vunpack.c.h.b16 %v97
      %v204 = vunpack.c.l.b16 %v98
      %v205 = vunpack.c.h.b16 %v98
      %v206 = vunpack.c.l.b16 %v99
      %v207 = vunpack.c.h.b16 %v99
      %v208 = vunpack.c.l.b16 %v100
      %v209 = vunpack.c.h.b16 %v100
      %v210 = vunpack.c.l.b16 %v101
      %v211 = vunpack.c.h.b16 %v101
      %v212 = vunpack.c.l.b16 %v102
      %v213 = vunpack.c.h.b16 %v102
      %v214 = vunpack.c.l.b16 %v103
      %v215 = vunpack.c.h.b16 %v103
      %v216 = vunpack.c.l.b16 %v104
      %v217 = vunpack.c.h.b16 %v104
      %v218 = vunpack.c.l.b16 %v105
      %v219 = vunpack.c.h.b16 %v105
      %v220 = vunpack.c.l.b16 %v106
      %v221 = vunpack.c.h.b16 %v106
      %v222 = vunpack.c.l.b16 %v107
      %v223 = vunpack.c.h.b16 %v107
      %v224 = vunpack.c.l.b16 %v108
      %v225 = vunpack.c.h.b16 %v108
      %v226 = vunpack.c.l.b16 %v109
      %v227 = vunpack.c.h.b16 %v109
      %v228 = vpack.c.b16 %v168, %v164
      %v229 = vpack.c.b16 %v169, %v165
      %v230 = vpack.c.b16 %v170, %v166
      %v231 = vpack.c.b16 %v171, %v167
      %v232 = vpack.c.b16 %v176, %v172
      %v233 = vpack.c.b16 %v177, %v173
      %v234 = vpack.c.b16 %v178, %v174
      %v235 = vpack.c.b16 %v179, %v175
      %v236 = vpack.c.b16 %v184, %v180
      %v237 = vpack.c.b16 %v185, %v181
      %v238 = vpack.c.b16 %v186, %v182
      %v239 = vpack.c.b16 %v187, %v183
      %v240 = vpack.c.b16 %v192, %v188
      %v241 = vpack.c.b16 %v193, %v189
      %v242 = vpack.c.b16 %v194, %v190
      %v243 = vpack.c.b16 %v195, %v191
      %v244 = vpack.c.b16 %v200, %v196
      %v245 = vpack.c.b16 %v201, %v197
      %v246 = vpack.c.b16 %v202, %v198
      %v247 = vpack.c.b16 %v203, %v199
      %v248 = vpack.c.b16 %v208, %v204
      %v249 = vpack.c.b16 %v209, %v205
      %v250 = vpack.c.b16 %v210, %v206
      %v251 = vpack.c.b16 %v211, %v207
      %v252 = vpack.c.b16 %v216, %v212
      %v253 = vpack.c.b16 %v217, %v213
      %v254 = vpack.c.b16 %v218, %v214
      %v255 = vpack.c.b16 %v219, %v215
      %v256 = vpack.c.b16 %v224, %v220
      %v257 = vpack.c.b16 %v225, %v221
      %v258 = vpack.c.b16 %v226, %v222
      %v259 = vpack.c.b16 %v227, %v223
      %292 = vmatprep.subr.bf16.mxu0 %v257
      %293 = vmatpush1.bf16.msra.mxu0 %v256
      %294 = vmatprep.subr.bf16.mxu0 %v253
      %295 = vmatpush1.bf16.msra.mxu0 %v252
      %296 = vmatprep.subr.bf16.mxu0 %v249
      %297 = vmatpush1.bf16.msra.mxu0 %v248
      %298 = vmatprep.subr.bf16.mxu0 %v245
      %299 = vmatpush1.bf16.msra.mxu0 %v244
      %300 = vmatprep.subr.bf16.mxu0 %v241
      %301 = vmatpush1.bf16.msra.mxu0 %v240
      %302 = vmatprep.subr.bf16.mxu0 %v237
      %303 = vmatpush1.bf16.msra.mxu0 %v236
      %304 = vmatprep.subr.bf16.mxu0 %v233
      %305 = vmatpush1.bf16.msra.mxu0 %v232
      %306 = vmatprep.subr.bf16.mxu0 %v229
      %307 = vmatpush1.bf16.msra.mxu0 %v228
      %308 = vmatprep.subr.bf16.mxu0 0
      %309 = vmatpush2.bf16.msra.mxu0 0
      %310 = vmatprep.subr.bf16.mxu0 0
      %311 = vmatpush2.bf16.msra.mxu0 0
      %312 = vmatprep.subr.bf16.mxu0 0
      %313 = vmatpush2.bf16.msra.mxu0 0
      %314 = vmatprep.subr.bf16.mxu0 0
      %315 = vmatpush2.bf16.msra.mxu0 0
      %316 = vmatprep.subr.bf16.mxu0 0
      %317 = vmatpush2.bf16.msra.mxu0 0
      %318 = vmatprep.subr.bf16.mxu0 0
      %319 = vmatpush2.bf16.msra.mxu0 0
      %320 = vmatprep.subr.bf16.mxu0 0
      %321 = vmatpush2.bf16.msra.mxu0 0
      %322 = vmatprep.subr.bf16.mxu0 0
      %323 = vmatpush2.bf16.msra.mxu0 0
      %324 = vmatprep.mubr.bf16.mxu0 0
      %325 = vmatmul.mubr.bf16.gmra.mxu0 %v77
      %v326 = vpop.f32.mrf.mxu0
      %v327 = vadd.f32 %v115, %v326
      %v328 = vpop.f32.mrf.mxu0
      %v329 = vadd.f32 %v119, %v328
      %v330 = vpop.f32.mrf.mxu0
      %v331 = vpop.f32.mrf.mxu0
      %332 = vdwg.mxu0
      %333 = vmatprep.subr.bf16.mxu0 %v259
      %334 = vmatpush1.bf16.msra.mxu0 %v258
      %335 = vmatprep.subr.bf16.mxu0 %v255
      %336 = vmatpush1.bf16.msra.mxu0 %v254
      %337 = vmatprep.subr.bf16.mxu0 %v251
      %338 = vmatpush1.bf16.msra.mxu0 %v250
      %339 = vmatprep.subr.bf16.mxu0 %v247
      %340 = vmatpush1.bf16.msra.mxu0 %v246
      %341 = vmatprep.subr.bf16.mxu0 %v243
      %342 = vmatpush1.bf16.msra.mxu0 %v242
      %343 = vmatprep.subr.bf16.mxu0 %v239
      %344 = vmatpush1.bf16.msra.mxu0 %v238
      %345 = vmatprep.subr.bf16.mxu0 %v235
      %346 = vmatpush1.bf16.msra.mxu0 %v234
      %347 = vmatprep.subr.bf16.mxu0 %v231
      %348 = vmatpush1.bf16.msra.mxu0 %v230
      %349 = vmatprep.subr.bf16.mxu0 0
      %350 = vmatpush2.bf16.msra.mxu0 0
      %351 = vmatprep.subr.bf16.mxu0 0
      %352 = vmatpush2.bf16.msra.mxu0 0
      %353 = vmatprep.subr.bf16.mxu0 0
      %354 = vmatpush2.bf16.msra.mxu0 0
      %355 = vmatprep.subr.bf16.mxu0 0
      %356 = vmatpush2.bf16.msra.mxu0 0
      %357 = vmatprep.subr.bf16.mxu0 0
      %358 = vmatpush2.bf16.msra.mxu0 0
      %359 = vmatprep.subr.bf16.mxu0 0
      %360 = vmatpush2.bf16.msra.mxu0 0
      %361 = vmatprep.subr.bf16.mxu0 0
      %362 = vmatpush2.bf16.msra.mxu0 0
      %363 = vmatprep.subr.bf16.mxu0 0
      %364 = vmatpush2.bf16.msra.mxu0 0
      %365 = vmatprep.mubr.bf16.mxu0 0
      %366 = vmatmul.mubr.bf16.gmra.mxu0 %v77
      %v367 = vpop.f32.mrf.mxu0
      %v368 = vadd.f32 %v123, %v367
      %v369 = vpop.f32.mrf.mxu0
      %v370 = vadd.f32 %v127, %v369
      %v371 = vpop.f32.mrf.mxu0
      %v372 = vpop.f32.mrf.mxu0
      %373 = vdwg.mxu0
      %374 = vst [vmem:[#allocation2] sm:$0xff] %v327
      %375 = vst [vmem:[#allocation2 + $0x8] sm:$0xff] %v329
      %376 = vst [vmem:[#allocation2 + $0x10] sm:$0xff] %v368
      %377 = vst [vmem:[#allocation2 + $0x18] sm:$0xff] %v370
    $region41: #{tpu_custom_call.1} parent=1 // pred_fallthru
      _
    %v378 = vld [vmem:[#allocation2] sm:$0xff]
    %v379 = vld [vmem:[#allocation2 + $0x8] sm:$0xff]
    %v380 = vld [vmem:[#allocation2 + $0x10] sm:$0xff]
    %v381 = vld [vmem:[#allocation2 + $0x18] sm:$0xff]
    %v382 = vpack.c.bf16 %v378, %v378
    %v383 = vpack.c.bf16 %v379, %v379
    %v384 = vpack.c.bf16 %v380, %v380
    %v385 = vpack.c.bf16 %v381, %v381
    %v386 = vld [vmem:[#allocation9] sm:$0xf]
    %v387 = vld [vmem:[#allocation9 + $0x4] sm:$0xf]
    %v388 = vld [vmem:[#allocation9 + $0x8] sm:$0xf]
    %v389 = vld [vmem:[#allocation9 + $0xc] sm:$0xf]
    %v390 = vld [vmem:[#allocation9 + $0x10] sm:$0xf]
    %v391 = vld [vmem:[#allocation9 + $0x14] sm:$0xf]
    %v392 = vld [vmem:[#allocation9 + $0x18] sm:$0xf]
    %v393 = vld [vmem:[#allocation9 + $0x1c] sm:$0xf]
    %v394 = vld [vmem:[#allocation9 + $0x20] sm:$0xf]
    %v395 = vld [vmem:[#allocation9 + $0x24] sm:$0xf]
    %v396 = vld [vmem:[#allocation9 + $0x28] sm:$0xf]
    %v397 = vld [vmem:[#allocation9 + $0x2c] sm:$0xf]
    %v398 = vld [vmem:[#allocation9 + $0x30] sm:$0xf]
    %v399 = vld [vmem:[#allocation9 + $0x34] sm:$0xf]
    %v400 = vld [vmem:[#allocation9 + $0x38] sm:$0xf]
    %v401 = vld [vmem:[#allocation9 + $0x3c] sm:$0xf]
    %v402 = vld [vmem:[#allocation9 + $0x40] sm:$0xf]
    %v403 = vld [vmem:[#allocation9 + $0x44] sm:$0xf]
    %v404 = vld [vmem:[#allocation9 + $0x48] sm:$0xf]
    %v405 = vld [vmem:[#allocation9 + $0x4c] sm:$0xf]
    %v406 = vld [vmem:[#allocation9 + $0x50] sm:$0xf]
    %v407 = vld [vmem:[#allocation9 + $0x54] sm:$0xf]
    %v408 = vld [vmem:[#allocation9 + $0x58] sm:$0xf]
    %v409 = vld [vmem:[#allocation9 + $0x5c] sm:$0xf]
    %v410 = vld [vmem:[#allocation9 + $0x60] sm:$0xf]
    %v411 = vld [vmem:[#allocation9 + $0x64] sm:$0xf]
    %v412 = vld [vmem:[#allocation9 + $0x68] sm:$0xf]
    %v413 = vld [vmem:[#allocation9 + $0x6c] sm:$0xf]
    %v414 = vld [vmem:[#allocation9 + $0x70] sm:$0xf]
    %v415 = vld [vmem:[#allocation9 + $0x74] sm:$0xf]
    %v416 = vld [vmem:[#allocation9 + $0x78] sm:$0xf]
    %v417 = vld [vmem:[#allocation9 + $0x7c] sm:$0xf]
    %v418 = vld [vmem:[#allocation9 + $0x80] sm:$0xf]
    %v419 = vld [vmem:[#allocation9 + $0x84] sm:$0xf]
    %v420 = vld [vmem:[#allocation9 + $0x88] sm:$0xf]
    %v421 = vld [vmem:[#allocation9 + $0x8c] sm:$0xf]
    %v422 = vld [vmem:[#allocation9 + $0x90] sm:$0xf]
    %v423 = vld [vmem:[#allocation9 + $0x94] sm:$0xf]
    %v424 = vld [vmem:[#allocation9 + $0x98] sm:$0xf]
    %v425 = vld [vmem:[#allocation9 + $0x9c] sm:$0xf]
    %v426 = vld [vmem:[#allocation9 + $0xa0] sm:$0xf]
    %v427 = vld [vmem:[#allocation9 + $0xa4] sm:$0xf]
    %v428 = vld [vmem:[#allocation9 + $0xa8] sm:$0xf]
    %v429 = vld [vmem:[#allocation9 + $0xac] sm:$0xf]
    %v430 = vld [vmem:[#allocation9 + $0xb0] sm:$0xf]
    %v431 = vld [vmem:[#allocation9 + $0xb4] sm:$0xf]
    %v432 = vld [vmem:[#allocation9 + $0xb8] sm:$0xf]
    %v433 = vld [vmem:[#allocation9 + $0xbc] sm:$0xf]
    %v434 = vld [vmem:[#allocation9 + $0xc0] sm:$0xf]
    %v435 = vld [vmem:[#allocation9 + $0xc4] sm:$0xf]
    %v436 = vld [vmem:[#allocation9 + $0xc8] sm:$0xf]
    %v437 = vld [vmem:[#allocation9 + $0xcc] sm:$0xf]
    %v438 = vld [vmem:[#allocation9 + $0xd0] sm:$0xf]
    %v439 = vld [vmem:[#allocation9 + $0xd4] sm:$0xf]
    %v440 = vld [vmem:[#allocation9 + $0xd8] sm:$0xf]
    %v441 = vld [vmem:[#allocation9 + $0xdc] sm:$0xf]
    %v442 = vld [vmem:[#allocation9 + $0xe0] sm:$0xf]
    %v443 = vld [vmem:[#allocation9 + $0xe4] sm:$0xf]
    %v444 = vld [vmem:[#allocation9 + $0xe8] sm:$0xf]
    %v445 = vld [vmem:[#allocation9 + $0xec] sm:$0xf]
    %v446 = vld [vmem:[#allocation9 + $0xf0] sm:$0xf]
    %v447 = vld [vmem:[#allocation9 + $0xf4] sm:$0xf]
    %v448 = vld [vmem:[#allocation9 + $0xf8] sm:$0xf]
    %v449 = vld [vmem:[#allocation9 + $0xfc] sm:$0xf]
    %v450 = vld [vmem:[%s4] sm:$0x1]
    %v452 = vlaneseq
    %v453 = vshrl.u32 %v452, 7
    %v454 = vsub.s32 0, %v453
    %v455 = vrot.slane %v450, %v454
    %v521 = vunpack.c.l.b16 %v386
    %v522 = vunpack.c.l.b16 %v387
    %v523 = vunpack.c.l.b16 %v388
    %v524 = vunpack.c.l.b16 %v389
    %v525 = vunpack.c.l.b16 %v390
    %v526 = vunpack.c.l.b16 %v391
    %v527 = vunpack.c.l.b16 %v392
    %v528 = vunpack.c.l.b16 %v393
    %v529 = vunpack.c.l.b16 %v394
    %v530 = vunpack.c.l.b16 %v395
    %v531 = vunpack.c.l.b16 %v396
    %v532 = vunpack.c.l.b16 %v397
    %v533 = vunpack.c.l.b16 %v398
    %v534 = vunpack.c.l.b16 %v399
    %v535 = vunpack.c.l.b16 %v400
    %v536 = vunpack.c.l.b16 %v401
    %v537 = vunpack.c.l.b16 %v402
    %v538 = vunpack.c.l.b16 %v403
    %v539 = vunpack.c.l.b16 %v404
    %v540 = vunpack.c.l.b16 %v405
    %v541 = vunpack.c.l.b16 %v406
    %v542 = vunpack.c.l.b16 %v407
    %v543 = vunpack.c.l.b16 %v408
    %v544 = vunpack.c.l.b16 %v409
    %v545 = vunpack.c.l.b16 %v410
    %v546 = vunpack.c.l.b16 %v411
    %v547 = vunpack.c.l.b16 %v412
    %v548 = vunpack.c.l.b16 %v413
    %v549 = vunpack.c.l.b16 %v414
    %v550 = vunpack.c.l.b16 %v415
    %v551 = vunpack.c.l.b16 %v416
    %v552 = vunpack.c.l.b16 %v417
    %v553 = vunpack.c.l.b16 %v418
    %v554 = vunpack.c.l.b16 %v419
    %v555 = vunpack.c.l.b16 %v420
    %v556 = vunpack.c.l.b16 %v421
    %v557 = vunpack.c.l.b16 %v422
    %v558 = vunpack.c.l.b16 %v423
    %v559 = vunpack.c.l.b16 %v424
    %v560 = vunpack.c.l.b16 %v425
    %v561 = vunpack.c.l.b16 %v426
    %v562 = vunpack.c.l.b16 %v427
    %v563 = vunpack.c.l.b16 %v428
    %v564 = vunpack.c.l.b16 %v429
    %v565 = vunpack.c.l.b16 %v430
    %v566 = vunpack.c.l.b16 %v431
    %v567 = vunpack.c.l.b16 %v432
    %v568 = vunpack.c.l.b16 %v433
    %v569 = vunpack.c.l.b16 %v434
    %v570 = vunpack.c.l.b16 %v435
    %v571 = vunpack.c.l.b16 %v436
    %v572 = vunpack.c.l.b16 %v437
    %v573 = vunpack.c.l.b16 %v438
    %v574 = vunpack.c.l.b16 %v439
    %v575 = vunpack.c.l.b16 %v440
    %v576 = vunpack.c.l.b16 %v441
    %v577 = vunpack.c.l.b16 %v442
    %v578 = vunpack.c.l.b16 %v443
    %v579 = vunpack.c.l.b16 %v444
    %v580 = vunpack.c.l.b16 %v445
    %v581 = vunpack.c.l.b16 %v446
    %v582 = vunpack.c.l.b16 %v447
    %v583 = vunpack.c.l.b16 %v448
    %v584 = vunpack.c.l.b16 %v449
    %v585 = vpack.c.b16 %v522, %v521
    %v586 = vpack.c.b16 %v524, %v523
    %v587 = vpack.c.b16 %v526, %v525
    %v588 = vpack.c.b16 %v528, %v527
    %v589 = vpack.c.b16 %v530, %v529
    %v590 = vpack.c.b16 %v532, %v531
    %v591 = vpack.c.b16 %v534, %v533
    %v592 = vpack.c.b16 %v536, %v535
    %v593 = vpack.c.b16 %v538, %v537
    %v594 = vpack.c.b16 %v540, %v539
    %v595 = vpack.c.b16 %v542, %v541
    %v596 = vpack.c.b16 %v544, %v543
    %v597 = vpack.c.b16 %v546, %v545
    %v598 = vpack.c.b16 %v548, %v547
    %v599 = vpack.c.b16 %v550, %v549
    %v600 = vpack.c.b16 %v552, %v551
    %v601 = vpack.c.b16 %v554, %v553
    %v602 = vpack.c.b16 %v556, %v555
    %v603 = vpack.c.b16 %v558, %v557
    %v604 = vpack.c.b16 %v560, %v559
    %v605 = vpack.c.b16 %v562, %v561
    %v606 = vpack.c.b16 %v564, %v563
    %v607 = vpack.c.b16 %v566, %v565
    %v608 = vpack.c.b16 %v568, %v567
    %v609 = vpack.c.b16 %v570, %v569
    %v610 = vpack.c.b16 %v572, %v571
    %v611 = vpack.c.b16 %v574, %v573
    %v612 = vpack.c.b16 %v576, %v575
    %v613 = vpack.c.b16 %v578, %v577
    %v614 = vpack.c.b16 %v580, %v579
    %v615 = vpack.c.b16 %v582, %v581
    %v616 = vpack.c.b16 %v584, %v583
    %649 = vmatprep.subr.bf16.mxu0 0
    %650 = vmatpush1.bf16.msra.mxu0 %v592
    %651 = vmatprep.subr.bf16.mxu0 0
    %652 = vmatpush1.bf16.msra.mxu0 %v591
    %653 = vmatprep.subr.bf16.mxu0 0
    %654 = vmatpush1.bf16.msra.mxu0 %v590
    %655 = vmatprep.subr.bf16.mxu0 0
    %656 = vmatpush1.bf16.msra.mxu0 %v589
    %657 = vmatprep.subr.bf16.mxu0 0
    %658 = vmatpush1.bf16.msra.mxu0 %v588
    %659 = vmatprep.subr.bf16.mxu0 0
    %660 = vmatpush1.bf16.msra.mxu0 %v587
    %661 = vmatprep.subr.bf16.mxu0 0
    %662 = vmatpush1.bf16.msra.mxu0 %v586
    %663 = vmatprep.subr.bf16.mxu0 0
    %664 = vmatpush1.bf16.msra.mxu0 %v585
    %665 = vmatprep.subr.bf16.mxu0 0
    %666 = vmatpush2.bf16.msra.mxu0 %v600
    %667 = vmatprep.subr.bf16.mxu0 0
    %668 = vmatpush2.bf16.msra.mxu0 %v599
    %669 = vmatprep.subr.bf16.mxu0 0
    %670 = vmatpush2.bf16.msra.mxu0 %v598
    %671 = vmatprep.subr.bf16.mxu0 0
    %672 = vmatpush2.bf16.msra.mxu0 %v597
    %673 = vmatprep.subr.bf16.mxu0 0
    %674 = vmatpush2.bf16.msra.mxu0 %v596
    %675 = vmatprep.subr.bf16.mxu0 0
    %676 = vmatpush2.bf16.msra.mxu0 %v595
    %677 = vmatprep.subr.bf16.mxu0 0
    %678 = vmatpush2.bf16.msra.mxu0 %v594
    %679 = vmatprep.subr.bf16.mxu0 0
    %680 = vmatpush2.bf16.msra.mxu0 %v593
    %681 = vmatprep.mubr.bf16.mxu0 %v383
    %682 = vmatmul.mubr.bf16.gmra.mxu0 %v382
    %v683 = vpop.f32.mrf.mxu0
    %v684 = vadd.f32 %v455, %v683
    %v685 = vpop.f32.mrf.mxu0
    %v686 = vpop.f32.mrf.mxu0
    %v687 = vpop.f32.mrf.mxu0
    %688 = vdwg.mxu0
    %689 = vmatprep.subr.bf16.mxu0 0
    %690 = vmatpush1.bf16.msra.mxu0 %v608
    %691 = vmatprep.subr.bf16.mxu0 0
    %692 = vmatpush1.bf16.msra.mxu0 %v607
    %693 = vmatprep.subr.bf16.mxu0 0
    %694 = vmatpush1.bf16.msra.mxu0 %v606
    %695 = vmatprep.subr.bf16.mxu0 0
    %696 = vmatpush1.bf16.msra.mxu0 %v605
    %697 = vmatprep.subr.bf16.mxu0 0
    %698 = vmatpush1.bf16.msra.mxu0 %v604
    %699 = vmatprep.subr.bf16.mxu0 0
    %700 = vmatpush1.bf16.msra.mxu0 %v603
    %701 = vmatprep.subr.bf16.mxu0 0
    %702 = vmatpush1.bf16.msra.mxu0 %v602
    %703 = vmatprep.subr.bf16.mxu0 0
    %704 = vmatpush1.bf16.msra.mxu0 %v601
    %705 = vmatprep.subr.bf16.mxu0 0
    %706 = vmatpush2.bf16.msra.mxu0 %v616
    %707 = vmatprep.subr.bf16.mxu0 0
    %708 = vmatpush2.bf16.msra.mxu0 %v615
    %709 = vmatprep.subr.bf16.mxu0 0
    %710 = vmatpush2.bf16.msra.mxu0 %v614
    %711 = vmatprep.subr.bf16.mxu0 0
    %712 = vmatpush2.bf16.msra.mxu0 %v613
    %713 = vmatprep.subr.bf16.mxu0 0
    %714 = vmatpush2.bf16.msra.mxu0 %v612
    %715 = vmatprep.subr.bf16.mxu0 0
    %716 = vmatpush2.bf16.msra.mxu0 %v611
    %717 = vmatprep.subr.bf16.mxu0 0
    %718 = vmatpush2.bf16.msra.mxu0 %v610
    %719 = vmatprep.subr.bf16.mxu0 0
    %720 = vmatpush2.bf16.msra.mxu0 %v609
    %721 = vmatprep.mubr.bf16.mxu0 %v385
    %722 = vmatmul.mubr.bf16.gmra.mxu0 %v384
    %v723 = vpop.f32.mrf.mxu0
    %v724 = vadd.f32 %v684, %v723
    %v725 = vpop.f32.mrf.mxu0
    %v726 = vpop.f32.mrf.mxu0
    %v727 = vpop.f32.mrf.mxu0
    %728 = vdwg.mxu0
    %729 = vst [vmem:[#allocation11] sm:$0xff] %v724
    // Predicated region
    $region42: #{tpu_custom_call.1} parent=1 // pred_check
      _
    $region43: #{tpu_custom_call.1} parent=1 // pred_check_branch
      %731 = sbr.rel (0) target = $region45
    $region44: #{tpu_custom_call.1} parent=1 // pred_region
      %s733 = ssub.s32 128, 128
      %734 = vsyncadd [#allocation5], %s733
      %s736 = sshll.u32 [#allocation11], 4
      %s737 = int_to_ptr.vmem [resolvable:$true] %s736
      %739 = dma.vmem_to_hbm [thread:$0]  %s737, 128, %s5, [#allocation5]
    $region45: #{tpu_custom_call.1} parent=1 // pred_fallthru
      _
    // Predicated region
    $region46: #{tpu_custom_call.1} parent=1 // pred_check
      _
    $region47: #{tpu_custom_call.1} parent=1 // pred_check_branch
      %741 = sbr.rel (0) target = $region49
    $region48: #{tpu_custom_call.1} parent=1 // pred_region
      %742 = dma.done [#allocation5], 128
    $region49: #{tpu_custom_call.1} parent=1 // pred_fallthru
      _
    %743 = vsyncpa [#allocation4], 1
    %744 = vsyncpa [#allocation7], 1
    %745 = vsyncpa [#allocation10], 1
    %746 = vsyncpa [#allocation5], 1

</llo_original>
